<compile_context>
chip_gen: v7x
topology: tpu7x:2x2x1
jax: 0.10.0
libtpu: 0.0.40
codegen_flags: <defaults>
</compile_context>

<pallas_src>
import functools
import math

import jax
import jax.numpy as jnp
from jax import lax
from jax.experimental import pallas as pl
from jax.experimental.pallas import tpu as pltpu

_SMOOTH = 1e-05
_EPS = 1e-07
_LANES = 128


def _ce_dice_stats_kernel(logits_ref, labels_ref, out_ref, *,
                          num_classes, block_rows, tiles_per_split,
                          first_masked_tile, any_masked, n_valid, rpad):
    """Accumulates per-class [sum_p, intersection, count, ce_nll] per lane."""
    s_idx = pl.program_id(1)
    t_idx = pl.program_id(2)
    g = s_idx * tiles_per_split + t_idx          # global (unclamped) row-tile index

    @pl.when(t_idx == 0)
    def _init():
        out_ref[...] = jnp.zeros_like(out_ref)

    C = num_classes
    TR = block_rows

    def _accumulate(masked):
        x = logits_ref[...].astype(jnp.float32)          # (C, TR, 128)
        lbl = labels_ref[...].astype(jnp.int32)          # (TR, 128)

        if masked:
            # Validity mask: pixel tail (< 128 remainder), partial row-tile
            # (Pallas-padded garbage rows) and fully out-of-range clamped tiles.
            row0 = g * TR
            r = lax.broadcasted_iota(jnp.int32, (TR, _LANES), 0)
            l = lax.broadcasted_iota(jnp.int32, (TR, _LANES), 1)
            pix = (row0 + r) * _LANES + l
            valid = pix < n_valid                        # (TR, 128) bool
            validf = valid.astype(jnp.float32)
            # Neutralize potential garbage (NaN/Inf) before transcendentals.
            x = jnp.where(valid[None, :, :], x, 0.0)

        # Numerically stable softmax / log-softmax over the class (leading) dim:
        # axis-0 reductions are pure per-lane VPU work across the C slabs.
        m = jnp.max(x, axis=0)                           # (TR, 128)
        xm = x - m[None, :, :]
        e = jnp.exp(xm)                                  # (C, TR, 128)  EUP
        den = jnp.sum(e, axis=0)                         # (TR, 128)
        inv = pl.reciprocal(den, approx=True)            # EUP slot, ~free
        inv = inv * (2.0 - den * inv)                    # one Newton step -> ~f32 exact
        p = e * inv[None, :, :]                          # softmax probabilities
        nll = jnp.log(den)[None, :, :] - xm              # -log_softmax, (C, TR, 128)

        # One-hot of the labels (labels outside [0, C) -- e.g. ignore_index --
        # never match, reproducing F.cross_entropy's ignore semantics).
        cls = lax.broadcasted_iota(jnp.int32, (C, TR, _LANES), 0)
        hit = lbl[None, :, :] == cls
        if masked:
            hit = jnp.logical_and(hit, valid[None, :, :])
        onehot = hit.astype(jnp.float32)

        # Per-class, per-lane partial sums (sublane reduction only; the cross-lane
        # reduction happens once in the wrapper).
        if masked:
            sum_p = jnp.sum(p * validf[None, :, :], axis=1)   # (C, 128)
        else:
            sum_p = jnp.sum(p, axis=1)                        # (C, 128)
        inter = jnp.sum(p * onehot, axis=1)                   # (C, 128)
        cnt = jnp.sum(onehot, axis=1)                         # (C, 128)
        ce = jnp.sum(nll * onehot, axis=1)                    # (C, 128)

        parts = [sum_p, inter, cnt, ce]
        if rpad > 4 * C:
            parts.append(jnp.zeros((rpad - 4 * C, _LANES), jnp.float32))
        slab = jnp.concatenate(parts, axis=0)                 # (RPAD, 128), aligned
        out_ref[...] = out_ref[...] + slab                    # single full-block RMW

    if not any_masked:
        _accumulate(masked=False)
    elif first_masked_tile <= 0:
        _accumulate(masked=True)
    else:
        @pl.when(g < first_masked_tile)
        def _fast():
            _accumulate(masked=False)

        @pl.when(g >= first_masked_tile)
        def _tail():
            _accumulate(masked=True)


def _vmem_budget():
    """(vmem_limit_bytes, f32_tile_cap_bytes, dma_target_bytes) per TPU generation."""
    try:
        vmem_cap = pltpu.get_tpu_info().vmem_capacity_bytes
    except Exception:
        vmem_cap = None
    if vmem_cap is not None and vmem_cap >= 96 * 1024 * 1024:
        # v5e / v6e: 128 MiB physical VMEM -> bigger tiles, raised scoped limit.
        return 64 * 1024 * 1024, 4 * 1024 * 1024, 2 * 1024 * 1024
    if vmem_cap is not None:
        # v7x: 64 MiB physical VMEM -> cap the f32 intermediate footprint.
        return 40 * 1024 * 1024, 2 * 1024 * 1024, 2 * 1024 * 1024
    # Unknown (query failed): conservative defaults, safe on all generations.
    return 32 * 1024 * 1024, 2 * 1024 * 1024, 2 * 1024 * 1024


def _pick_block_rows(num_rows, num_classes, itemsize, requested,
                     dma_target_bytes, f32_cap_bytes):
    """Rows of 128 pixels per tile, sized from the real input dtype."""
    if requested is not None:
        tr = int(requested)
    else:
        per_row_dma = num_classes * _LANES * itemsize      # bytes streamed / row
        per_row_f32 = num_classes * _LANES * 4             # f32 intermediates / row
        tr = min(dma_target_bytes // per_row_dma, f32_cap_bytes // per_row_f32)
        tr = max(tr, 8)
    if tr >= num_rows:
        return num_rows
    # multiple of 32 keeps the block legal for f32/bf16/int8 inputs
    return min(num_rows, max(32, (tr // 32) * 32))


@functools.partial(jax.jit, static_argnames=("block_rows", "pixel_splits"))
def mutil_ce_dice_loss(y_pred_logits, y_true, alpha, *,
                       block_rows=None, pixel_splits=2):
    """Pallas implementation of MutilCrossEntropyDiceLoss.forward."""
    B, C = y_pred_logits.shape[0], y_pred_logits.shape[1]
    N = math.prod(y_pred_logits.shape[2:])

    logits = y_pred_logits.reshape(B, C, N)                   # native dtype
    label_dtype = jnp.int8 if C <= 127 else jnp.int32         # labels are pure HBM traffic
    labels = y_true.reshape(B, N).astype(label_dtype)

    NR = (N + _LANES - 1) // _LANES
    N128 = NR * _LANES
    if N128 != N:
        # Rare path (H*W not a multiple of 128): pad only the lane remainder.
        logits = jnp.pad(logits, ((0, 0), (0, 0), (0, N128 - N)))
        labels = jnp.pad(labels, ((0, 0), (0, N128 - N)))
    logits = logits.reshape(B, C, NR, _LANES)
    labels = labels.reshape(B, NR, _LANES)

    vmem_limit, f32_cap, dma_target = _vmem_budget()
    itemsize = jnp.dtype(logits.dtype).itemsize
    TR = _pick_block_rows(NR, C, itemsize, block_rows, dma_target, f32_cap)
    T = (NR + TR - 1) // TR                                   # real row-tile count

    # Pixel-range split: second "parallel" axis so both v7x TensorCores get work
    # even when B == 1 (no-op on single-TC v5e/v6e).
    S = max(1, min(int(pixel_splits), T))
    TPS = (T + S - 1) // S                                    # tiles per split
    total_cov = S * TPS

    has_tail = (N != T * TR * _LANES)
    first_masked = (T - 1) if has_tail else T                 # tiles >= this need masking
    any_masked = first_masked < total_cov
    clamp_needed = total_cov > T

    RPAD = max(8, ((4 * C + 7) // 8) * 8)                     # 8-sublane aligned slab

    def _row_block(s, t):
        g = s * TPS + t
        if clamp_needed:
            g = jnp.minimum(g, T - 1)                         # clamped tiles are fully masked
        return g

    kernel = functools.partial(
        _ce_dice_stats_kernel,
        num_classes=C, block_rows=TR, tiles_per_split=TPS,
        first_masked_tile=first_masked, any_masked=any_masked,
        n_valid=N, rpad=RPAD)

    stats = pl.pallas_call(
        kernel,
        out_shape=jax.ShapeDtypeStruct((B, S, RPAD, _LANES), jnp.float32),
        grid_spec=pltpu.PrefetchScalarGridSpec(
            num_scalar_prefetch=0,
            grid=(B, S, TPS),
            in_specs=[
                pl.BlockSpec((None, C, TR, _LANES),
                             lambda b, s, t: (b, 0, _row_block(s, t), 0)),
                pl.BlockSpec((None, TR, _LANES),
                             lambda b, s, t: (b, _row_block(s, t), 0)),
            ],
            out_specs=pl.BlockSpec((None, None, RPAD, _LANES),
                                   lambda b, s, t: (b, s, 0, 0)),
        ),
        compiler_params=pltpu.CompilerParams(
            dimension_semantics=("parallel", "parallel", "arbitrary"),
            vmem_limit_bytes=vmem_limit,
        ),
    )(logits, labels)

    # Tiny O(C) combine in the wrapper (sum over batch/split slabs and lanes).
    totals = jnp.sum(stats[:, :, :4 * C, :], axis=(0, 1, 3)).reshape(4, C)
    sum_p, inter, cnt, ce_sum = totals[0], totals[1], totals[2], totals[3]

    mask = cnt > 0.5                                          # class-presence mask
    maskf = mask.astype(jnp.float32)
    alpha = jnp.asarray(alpha, jnp.float32)

    # --- MutilDiceLoss ---
    gen_dice = jnp.maximum((2.0 * inter + _SMOOTH) / (cnt + sum_p + _SMOOTH), _EPS)
    dice = jnp.sum(-gen_dice * maskf * alpha) / jnp.count_nonzero(mask).astype(jnp.float32)

    # --- MutilCrossEntropyLoss (weight = class-presence mask, weighted mean) ---
    ce = jnp.sum(maskf * ce_sum) / jnp.sum(maskf * cnt)

    return ce + dice


def _reference(y_pred_logits, y_true, alpha):
    """Pure-JAX replica of the PyTorch module (for correctness check)."""
    B, C = y_pred_logits.shape[0], y_pred_logits.shape[1]
    logits = y_pred_logits.astype(jnp.float32).reshape(B, C, -1)
    labels = y_true.reshape(B, -1).astype(jnp.int32)
    onehot = jnp.transpose(jax.nn.one_hot(labels, C, dtype=jnp.float32), (0, 2, 1))
    probs = jax.nn.softmax(logits, axis=1)

    inter = jnp.sum(onehot * probs, axis=(0, 2))
    denom = jnp.sum(onehot + probs, axis=(0, 2))
    gen_dice = jnp.maximum((2.0 * inter + _SMOOTH) / (denom + _SMOOTH), _EPS)
    mask = jnp.sum(onehot, axis=(0, 2)) > 0
    dice = jnp.sum(-gen_dice * mask.astype(jnp.float32) * jnp.asarray(alpha, jnp.float32))
    dice = dice / jnp.count_nonzero(mask).astype(jnp.float32)

    logp = jax.nn.log_softmax(logits, axis=1)
    nll = -jnp.take_along_axis(logp, labels[:, None, :], axis=1)[:, 0, :]
    w = mask.astype(jnp.float32)[labels]
    ce = jnp.sum(w * nll) / jnp.sum(w)
    return ce + dice


if __name__ == "__main__":
    key = jax.random.PRNGKey(0)
    k1, k2 = jax.random.split(key)
    B, C, H, W = 2, 4, 16, 16
    y_pred_logits = jax.random.normal(k1, (B, C, H, W), dtype=jnp.float32)
    y_true = jax.random.randint(k2, (B, H, W), 0, C, dtype=jnp.int32)
    alpha = jnp.array([0.1, 1.0, 1.0, 1.0], dtype=jnp.float32)

    loss = mutil_ce_dice_loss(y_pred_logits, y_true, alpha)
    jax.block_until_ready(loss)

    ref = _reference(y_pred_logits, y_true, alpha)
    assert jnp.allclose(loss, ref, atol=1e-4, rtol=1e-4), (loss, ref)
    print("KERNEL_OK")
</pallas_src>

<mosaic_0001>
module attributes {stable_mosaic.version = 11 : i64} {
  func.func @_ce_dice_stats_kernel(%arg0: i32, %arg1: i32, %arg2: i32, %arg3: memref<1x4x2x128xf32, #tpu.memory_space<vmem>>, %arg4: memref<1x2x128xi8, #tpu.memory_space<vmem>>, %arg5: memref<1x1x16x128xf32, #tpu.memory_space<vmem>>) attributes {dimension_semantics = [#tpu.dimension_semantics<parallel>, #tpu.dimension_semantics<parallel>, #tpu.dimension_semantics<arbitrary>], iteration_bounds = array<i64: 2, 1, 1>, scalar_prefetch = 0 : i64, scratch_operands = 0 : i64, tpu.core_type = #tpu.core_type<tc>, window_params = [{transform_indices = @transform_0, window_bounds = array<i64: 1, 4, 2, 128>}, {transform_indices = @transform_1, window_bounds = array<i64: 1, 2, 128>}, {transform_indices = @transform_2, window_bounds = array<i64: 1, 1, 16, 128>}]} {
    %c0_i32 = arith.constant 0 : i32
    %0 = arith.cmpi eq, %arg2, %c0_i32 : i32
    %1 = arith.extui %0 : i1 to i32
    %c0_i32_0 = arith.constant 0 : i32
    %2 = arith.cmpi ne, %1, %c0_i32_0 : i32
    scf.if %2 {
      %cst_21 = arith.constant 0.000000e+00 : f32
      %45 = vector.broadcast %cst_21 : f32 to vector<16x128xf32>
      %c0_22 = arith.constant 0 : index
      %c0_23 = arith.constant 0 : index
      %c0_24 = arith.constant 0 : index
      %c0_25 = arith.constant 0 : index
      %46 = vector.load %arg5[%c0_22, %c0_23, %c0_24, %c0_25] : memref<1x1x16x128xf32, #tpu.memory_space<vmem>>, vector<1x1x16x128xf32>
      %47 = vector.shape_cast %46 : vector<1x1x16x128xf32> to vector<16x128xf32>
      %48 = vector.shape_cast %45 : vector<16x128xf32> to vector<1x1x16x128xf32>
      tpu.vector_store %arg5[%c0_22, %c0_23, %c0_24, %c0_25], %48 {strides = array<i32>} : memref<1x1x16x128xf32, #tpu.memory_space<vmem>>, vector<1x1x16x128xf32>,
    } else {
    }
    %c0 = arith.constant 0 : index
    %c0_1 = arith.constant 0 : index
    %c0_2 = arith.constant 0 : index
    %c0_3 = arith.constant 0 : index
    %3 = vector.load %arg3[%c0, %c0_1, %c0_2, %c0_3] : memref<1x4x2x128xf32, #tpu.memory_space<vmem>>, vector<1x4x2x128xf32>
    %4 = vector.shape_cast %3 : vector<1x4x2x128xf32> to vector<4x2x128xf32>
    %c0_4 = arith.constant 0 : index
    %c0_5 = arith.constant 0 : index
    %c0_6 = arith.constant 0 : index
    %5 = vector.load %arg4[%c0_4, %c0_5, %c0_6] : memref<1x2x128xi8, #tpu.memory_space<vmem>>, vector<1x2x128xi8>
    %6 = vector.shape_cast %5 : vector<1x2x128xi8> to vector<2x128xi8>
    %7 = arith.extsi %6 : vector<2x128xi8> to vector<2x128xi32>
    %cst = arith.constant dense<0xFF800000> : vector<2x128xf32>
    %8 = vector.multi_reduction <maximumf>, %4, %cst [0] : vector<4x2x128xf32> to vector<2x128xf32>
    %9 = vector.shape_cast %8 : vector<2x128xf32> to vector<1x2x128xf32>
    %10 = vector.broadcast %9 : vector<1x2x128xf32> to vector<4x2x128xf32>
    %11 = arith.subf %4, %10 : vector<4x2x128xf32>
    %12 = math.exp %11 : vector<4x2x128xf32>
    %cst_7 = arith.constant dense<0.000000e+00> : vector<2x128xf32>
    %13 = vector.multi_reduction <add>, %12, %cst_7 [0] : vector<4x2x128xf32> to vector<2x128xf32>
    %14 = tpu.reciprocal %13 {approx = true} : vector<2x128xf32> -> vector<2x128xf32>
    %15 = arith.mulf %13, %14 : vector<2x128xf32>
    %cst_8 = arith.constant 2.000000e+00 : f32
    %16 = vector.broadcast %cst_8 : f32 to vector<2x128xf32>
    %17 = arith.subf %16, %15 : vector<2x128xf32>
    %18 = arith.mulf %14, %17 : vector<2x128xf32>
    %19 = vector.shape_cast %18 : vector<2x128xf32> to vector<1x2x128xf32>
    %20 = vector.broadcast %19 : vector<1x2x128xf32> to vector<4x2x128xf32>
    %21 = arith.mulf %12, %20 : vector<4x2x128xf32>
    %22 = math.log %13 : vector<2x128xf32>
    %23 = vector.shape_cast %22 : vector<2x128xf32> to vector<1x2x128xf32>
    %24 = vector.broadcast %23 : vector<1x2x128xf32> to vector<4x2x128xf32>
    %25 = arith.subf %24, %11 : vector<4x2x128xf32>
    %26 = tpu.iota {dimensions = array<i32: 0>} : vector<4x2x128xi32>
    %27 = vector.shape_cast %7 : vector<2x128xi32> to vector<1x2x128xi32>
    %28 = vector.broadcast %27 : vector<1x2x128xi32> to vector<4x2x128xi32>
    %29 = arith.cmpi eq, %28, %26 : vector<4x2x128xi32>
    %30 = arith.extui %29 : vector<4x2x128xi1> to vector<4x2x128xi32>
    %31 = arith.sitofp %30 : vector<4x2x128xi32> to vector<4x2x128xf32>
    %cst_9 = arith.constant dense<0.000000e+00> : vector<4x128xf32>
    %32 = vector.multi_reduction <add>, %21, %cst_9 [1] : vector<4x2x128xf32> to vector<4x128xf32>
    %33 = arith.mulf %21, %31 : vector<4x2x128xf32>
    %cst_10 = arith.constant dense<0.000000e+00> : vector<4x128xf32>
    %34 = vector.multi_reduction <add>, %33, %cst_10 [1] : vector<4x2x128xf32> to vector<4x128xf32>
    %cst_11 = arith.constant dense<0.000000e+00> : vector<4x128xf32>
    %35 = vector.multi_reduction <add>, %31, %cst_11 [1] : vector<4x2x128xf32> to vector<4x128xf32>
    %36 = arith.mulf %25, %31 : vector<4x2x128xf32>
    %cst_12 = arith.constant dense<0.000000e+00> : vector<4x128xf32>
    %37 = vector.multi_reduction <add>, %36, %cst_12 [1] : vector<4x2x128xf32> to vector<4x128xf32>
    %38 = tpu.concatenate %32, %34, %35, %37 in 0 : vector<4x128xf32>, vector<4x128xf32>, vector<4x128xf32>, vector<4x128xf32> -> vector<16x128xf32>
    %c0_13 = arith.constant 0 : index
    %c0_14 = arith.constant 0 : index
    %c0_15 = arith.constant 0 : index
    %c0_16 = arith.constant 0 : index
    %39 = vector.load %arg5[%c0_13, %c0_14, %c0_15, %c0_16] : memref<1x1x16x128xf32, #tpu.memory_space<vmem>>, vector<1x1x16x128xf32>
    %40 = vector.shape_cast %39 : vector<1x1x16x128xf32> to vector<16x128xf32>
    %41 = arith.addf %40, %38 : vector<16x128xf32>
    %c0_17 = arith.constant 0 : index
    %c0_18 = arith.constant 0 : index
    %c0_19 = arith.constant 0 : index
    %c0_20 = arith.constant 0 : index
    %42 = vector.load %arg5[%c0_17, %c0_18, %c0_19, %c0_20] : memref<1x1x16x128xf32, #tpu.memory_space<vmem>>, vector<1x1x16x128xf32>
    %43 = vector.shape_cast %42 : vector<1x1x16x128xf32> to vector<16x128xf32>
    %44 = vector.shape_cast %41 : vector<16x128xf32> to vector<1x1x16x128xf32>
    tpu.vector_store %arg5[%c0_17, %c0_18, %c0_19, %c0_20], %44 {strides = array<i32>} : memref<1x1x16x128xf32, #tpu.memory_space<vmem>>, vector<1x1x16x128xf32>,
    return
  }
  func.func @transform_0(%arg0: i32, %arg1: i32, %arg2: i32) -> (i32, i32, i32, i32) {
    %c1_i32 = arith.constant 1 : i32
    %0 = arith.muli %arg1, %c1_i32 : i32
    %1 = arith.addi %0, %arg2 : i32
    %c0_i32 = arith.constant 0 : i32
    %c0_i32_0 = arith.constant 0 : i32
    %c0_i32_1 = arith.constant 0 : i32
    return %arg0, %c0_i32, %1, %c0_i32_0 : i32, i32, i32, i32
  }
  func.func @transform_1(%arg0: i32, %arg1: i32, %arg2: i32) -> (i32, i32, i32) {
    %c1_i32 = arith.constant 1 : i32
    %0 = arith.muli %arg1, %c1_i32 : i32
    %1 = arith.addi %0, %arg2 : i32
    %c0_i32 = arith.constant 0 : i32
    %c0_i32_0 = arith.constant 0 : i32
    return %arg0, %1, %c0_i32 : i32, i32, i32
  }
  func.func @transform_2(%arg0: i32, %arg1: i32, %arg2: i32) -> (i32, i32, i32, i32) {
    %c0_i32 = arith.constant 0 : i32
    %c0_i32_0 = arith.constant 0 : i32
    %c0_i32_1 = arith.constant 0 : i32
    return %arg0, %arg1, %c0_i32, %c0_i32_0 : i32, i32, i32, i32
  }
}

</mosaic_0001>

<llo_original>
// kernel: mutil_ce_dice_loss.1
$region0: #{mutil_ce_dice_loss.1}
  #allocation0 [shape = 'u32[]', space=smem, size = 0x4, offset = 0x4, fixed_abs, tag = 'smem constant byte address 0x4 - core index']
  #allocation1 [shape = 'u32[144,128]{1,0:T(1,128)}', space=vmem, size = 0x12000, scoped, tag = 'internal scratch']
  %s0 = inlined_call_operand.vmem [shape: f32[2,4,2,128], index: 0, kind: input, shape index: {}]
  %s1 = inlined_call_operand.vmem [shape: s8[2,2,128], index: 1, kind: input, shape index: {}]
  %s2 = inlined_call_operand.vmem [shape: f32[2,1,16,128], index: 2, kind: output, shape index: {}]
  %s3 = sld [smem:[#allocation0]]
  $region45: #{mutil_ce_dice_loss.1} parent=0
    _
  %s5 = ssub.s32 1, %s3
  %s6 = scalar_select 0, %s5, %s3
  loop: start=0, step=1, limit=4
  $region2: #{mutil_ce_dice_loss.1} parent=0 // loop_pre_header
    _
  $region3: #{mutil_ce_dice_loss.1} parent=0 // loop_header
    %s8 = sphi 0, %s12
    %p9 = scmp.ge.s32.totalorder %s8, 4
    %s15 = sphi 0, %s34
    %s16 = sphi 0, %s30
    %s17 = sphi 0, %s26
    %s18 = sphi 0, %s15
    %s19 = sphi 0, %s16
    %s20 = sphi 0, %s17
    %s21 = sphi 0, %s18
    %s22 = sphi 0, %s19
    %s23 = sphi 0, %s20
    %s41 = sphi 0, %s43
    %s44 = sphi 0, %s41
    %s45 = sphi 0, %s44
    %s61 = sphi 0, %s45
    %s71 = sphi 0, %s73
    %s74 = sphi 0, %s71
    %s75 = sphi 0, %s74
    %s91 = sphi 0, %s75
    %s99 = sphi 0, %s101
    %s102 = sphi 0, %s99
    %s103 = sphi 0, %s102
    %s119 = sphi 0, %s103
  $region4: #{mutil_ce_dice_loss.1} parent=0 // loop_header_branch
    %11 = sbr.rel (%p9) target = $region8
  $region5: #{mutil_ce_dice_loss.1} parent=0 // loop_body
    %s13 = ssub.s32 %s8, 1
    %s14 = ssub.s32 %s8, 2
    %s24 = sadd.s32 1, %s17
    %p25 = scmp.ge.s32.totalorder %s24, 1
    %s26 = scalar_select %p25, 0, %s24
    %s27 = sadd.s32 1, %s16
    %s28 = scalar_select %p25, %s27, %s16
    %p29 = scmp.ge.s32.totalorder %s28, 1
    %s30 = scalar_select %p29, 0, %s28
    %s31 = sadd.s32 1, %s15
    %s32 = scalar_select %p29, %s31, %s15
    %p33 = scmp.ge.s32.totalorder %s32, 2
    %s34 = scalar_select %p33, 0, %s32
    %s35 = sadd.s32 %s16, %s17
    %s36 = sadd.s32 %s30, %s26
    %s37 = ssub.s32 %s15, %s34
    %s38 = ssub.s32 %s35, %s36
    %s39 = sor.u32 %s37, %s38
    %p40 = scmp.eq.s32.totalorder %s39, 0
    %s42 = sadd.s32 %s41, 1
    %s43 = scalar_select %p40, %s41, %s42
    %p46 = pneg %p40
    %p47 = scmp.eq.s32.totalorder %s8, 1
    %p48 = por %p46, %p47
    %p49 = scmp.ne.s32.totalorder %s41, %s44
    %p50 = scmp.eq.s32.totalorder %s8, 0
    %p51 = por %p49, %p50
    %p52 = scmp.ne.s32.totalorder %s41, %s44
    %p53 = scmp.eq.s32.totalorder %s13, 1
    %p54 = por %p52, %p53
    %p55 = scmp.ne.s32.totalorder %s44, %s45
    %p56 = scmp.eq.s32.totalorder %s13, 0
    %p57 = por %p55, %p56
    %p58 = scmp.ne.s32.totalorder %s44, %s45
    %p59 = scmp.eq.s32.totalorder %s14, 1
    %p60 = por %p58, %p59
    %p62 = scmp.ne.s32.totalorder %s45, %s61
    %p63 = scmp.eq.s32.totalorder %s14, 0
    %p64 = por %p62, %p63
    %s65 = sadd.s32 %s16, %s17
    %s66 = sadd.s32 %s30, %s26
    %s67 = ssub.s32 %s15, %s34
    %s68 = ssub.s32 %s65, %s66
    %s69 = sor.u32 %s67, %s68
    %p70 = scmp.eq.s32.totalorder %s69, 0
    %s72 = sadd.s32 %s71, 1
    %s73 = scalar_select %p70, %s71, %s72
    %p76 = pneg %p70
    %p77 = scmp.eq.s32.totalorder %s8, 1
    %p78 = por %p76, %p77
    %p79 = scmp.ne.s32.totalorder %s71, %s74
    %p80 = scmp.eq.s32.totalorder %s8, 0
    %p81 = por %p79, %p80
    %p82 = scmp.ne.s32.totalorder %s71, %s74
    %p83 = scmp.eq.s32.totalorder %s13, 1
    %p84 = por %p82, %p83
    %p85 = scmp.ne.s32.totalorder %s74, %s75
    %p86 = scmp.eq.s32.totalorder %s13, 0
    %p87 = por %p85, %p86
    %p88 = scmp.ne.s32.totalorder %s74, %s75
    %p89 = scmp.eq.s32.totalorder %s14, 1
    %p90 = por %p88, %p89
    %p92 = scmp.ne.s32.totalorder %s75, %s91
    %p93 = scmp.eq.s32.totalorder %s14, 0
    %p94 = por %p92, %p93
    %s95 = ssub.s32 %s15, %s34
    %s96 = ssub.s32 %s16, %s30
    %s97 = sor.u32 %s95, %s96
    %p98 = scmp.eq.s32.totalorder %s97, 0
    %s100 = sadd.s32 %s99, 1
    %s101 = scalar_select %p98, %s99, %s100
    %p104 = pneg %p98
    %p105 = scmp.eq.s32.totalorder %s8, 1
    %p106 = por %p104, %p105
    %p107 = scmp.ne.s32.totalorder %s99, %s102
    %p108 = scmp.eq.s32.totalorder %s8, 0
    %p109 = por %p107, %p108
    %p110 = scmp.ne.s32.totalorder %s99, %s102
    %p111 = scmp.eq.s32.totalorder %s13, 1
    %p112 = por %p110, %p111
    %p113 = scmp.ne.s32.totalorder %s102, %s103
    %p114 = scmp.eq.s32.totalorder %s13, 0
    %p115 = por %p113, %p114
    %p116 = scmp.ne.s32.totalorder %s102, %s103
    %p117 = scmp.eq.s32.totalorder %s14, 1
    %p118 = por %p116, %p117
    %p120 = scmp.ne.s32.totalorder %s103, %s119
    %p121 = scmp.eq.s32.totalorder %s14, 0
    %p122 = por %p120, %p121
    %p123 = scmp.le.s32.totalorder 1, %s8
    %p124 = scmp.lt.s32.totalorder %s8, 3
    %p125 = pnand %p123, %p124
    %p126 = pneg %p125
    // Predicated region
    $region9: #{mutil_ce_dice_loss.1} parent=5 // pred_check
      _
    $region10: #{mutil_ce_dice_loss.1} parent=5 // pred_check_branch
      %128 = sbr.rel (%p125) target = $region12
    $region11: #{mutil_ce_dice_loss.1} parent=5 // pred_region
      %s129 = ssub.s32 %s8, 1
    $region12: #{mutil_ce_dice_loss.1} parent=5 // pred_fallthru
      _
    %p130 = scmp.lt.s32.totalorder %s8, 2
    // Predicated region
    $region13: #{mutil_ce_dice_loss.1} parent=5 // pred_check
      %p131 = pneg %p130
    $region14: #{mutil_ce_dice_loss.1} parent=5 // pred_check_branch
      %133 = sbr.rel (%p131) target = $region16
    $region15: #{mutil_ce_dice_loss.1} parent=5 // pred_region
      // Predicated region
      $region17: #{mutil_ce_dice_loss.1} parent=15 // pred_check
        %p134 = pneg %p51
      $region18: #{mutil_ce_dice_loss.1} parent=15 // pred_check_branch
        %136 = sbr.rel (%p134) target = $region20
      $region19: #{mutil_ce_dice_loss.1} parent=15 // pred_region
        %s137 = sadd.s32 %s16, %s17
        %p138 = scmp.lt.s32.totalorder %s15, 1
        %s139 = scalar_select %p138, %s15, 1
        %p140 = scmp.lt.s32.totalorder %s137, 0
        %s141 = scalar_select %p140, %s137, 0
        %s142 = smul.addr %s139, 4
        %s143 = sadd.s32 %s141, %s142
        %s144 = smul.addr %s143, 2
        %s145 = scalar_lea.vmem %s0, %s144
        %s146 = sadd.s32 %s16, %s17
      $region20: #{mutil_ce_dice_loss.1} parent=15 // pred_fallthru
        _
      // Predicated region
      $region21: #{mutil_ce_dice_loss.1} parent=15 // pred_check
        %p147 = pneg %p81
      $region22: #{mutil_ce_dice_loss.1} parent=15 // pred_check_branch
        %149 = sbr.rel (%p147) target = $region24
      $region23: #{mutil_ce_dice_loss.1} parent=15 // pred_region
        %s150 = sadd.s32 %s16, %s17
        %p151 = scmp.lt.s32.totalorder %s15, 1
        %s152 = scalar_select %p151, %s15, 1
        %p153 = scmp.lt.s32.totalorder %s150, 0
        %s154 = scalar_select %p153, %s150, 0
        %s155 = sadd.s32 %s154, %s152
        %s156 = scalar_lea.vmem %s1, %s155
        %s157 = sadd.s32 %s16, %s17
      $region24: #{mutil_ce_dice_loss.1} parent=15 // pred_fallthru
        _
    $region16: #{mutil_ce_dice_loss.1} parent=5 // pred_fallthru
      _
    %p158 = scmp.le.s32.totalorder 1, %s8
    %p159 = scmp.lt.s32.totalorder %s8, 3
    %p160 = pnand %p158, %p159
    %p161 = pneg %p160
    // Predicated region
    $region25: #{mutil_ce_dice_loss.1} parent=5 // pred_check
      _
    $region26: #{mutil_ce_dice_loss.1} parent=5 // pred_check_branch
      %163 = sbr.rel (%p160) target = $region28
    $region27: #{mutil_ce_dice_loss.1} parent=5 // pred_region
      %s164 = ssub.s32 %s8, 1
      %s165 = sadd.s32 %s19, %s20
      %p166 = scmp.lt.s32.totalorder %s18, 1
      %s167 = scalar_select %p166, %s18, 1
      %p168 = scmp.lt.s32.totalorder %s165, 0
      %s169 = scalar_select %p168, %s165, 0
      %s170 = smul.addr %s167, 4
      %s171 = sadd.s32 %s169, %s170
      %s172 = smul.addr %s171, 2
      %s173 = scalar_lea.vmem %s0, %s172
      %p174 = pneg %p57
      %p175 = pneg %p54
      %s176 = sadd.s32 %s19, %s20
      %p177 = scmp.lt.s32.totalorder %s18, 1
      %s178 = scalar_select %p177, %s18, 1
      %p179 = scmp.lt.s32.totalorder %s176, 0
      %s180 = scalar_select %p179, %s176, 0
      %s181 = sadd.s32 %s180, %s178
      %s182 = scalar_lea.vmem %s1, %s181
      %p183 = pneg %p87
      %p184 = pneg %p84
      %p185 = pneg %p115
      %p186 = pneg %p112
      %p187 = scmp.lt.s32.totalorder %s18, 1
      %s188 = scalar_select %p187, %s18, 1
      %p189 = scmp.lt.s32.totalorder %s19, 0
      %s190 = scalar_select %p189, %s19, 0
      %s191 = smul.addr %s190, 2
      %s192 = smul.addr %s188, 2
      %s193 = sadd.s32 %s191, %s192
      %s194 = smul.addr %s193, 8
      %s195 = scalar_lea.vmem %s2, %s194
      %s196 = sadd.s32 %s19, %s20
      %p197 = scmp.lt.s32.totalorder %s18, 1
      %s198 = scalar_select %p197, %s18, 1
      %p199 = scmp.lt.s32.totalorder %s196, 0
      %s200 = scalar_select %p199, %s196, 0
      %s201 = smul.addr %s198, 4
      %s202 = sadd.s32 %s200, %s201
      %s203 = smul.addr %s202, 2
      %s204 = scalar_lea.vmem %s0, %s203
      %s205 = sadd.s32 %s19, %s20
      %s206 = sadd.s32 %s19, %s20
      %p207 = scmp.lt.s32.totalorder %s18, 1
      %s208 = scalar_select %p207, %s18, 1
      %p209 = scmp.lt.s32.totalorder %s206, 0
      %s210 = scalar_select %p209, %s206, 0
      %s211 = sadd.s32 %s210, %s208
      %s212 = scalar_lea.vmem %s1, %s211
      %s213 = sadd.s32 %s19, %s20
      %p214 = scmp.lt.s32.totalorder %s18, 1
      %s215 = scalar_select %p214, %s18, 1
      %p216 = scmp.lt.s32.totalorder %s19, 0
      %s217 = scalar_select %p216, %s19, 0
      %s218 = smul.addr %s217, 2
      %s219 = smul.addr %s215, 2
      %s220 = sadd.s32 %s218, %s219
      %s221 = smul.addr %s220, 8
      %s222 = scalar_lea.vmem %s2, %s221
      %p223 = scmp.eq.s32.totalorder %s20, 0
      // Predicated region
      $region29: #{mutil_ce_dice_loss.1} parent=27 // pred_check
        %p224 = pneg %p223
      $region30: #{mutil_ce_dice_loss.1} parent=27 // pred_check_branch
        %226 = sbr.rel (%p224) target = $region32
      $region31: #{mutil_ce_dice_loss.1} parent=27 // pred_region
        %227 = vst [vmem:[%s222] sm:$0xff] 0.0
        %228 = vst [vmem:[%s222 + $0x8] sm:$0xff] 0.0
      $region32: #{mutil_ce_dice_loss.1} parent=27 // pred_fallthru
        _
      %v229 = vld [vmem:[%s204] sm:$0x3]
      %v230 = vld [vmem:[%s204 + $0x2] sm:$0x3]
      %v231 = vld [vmem:[%s204 + $0x4] sm:$0x3]
      %v232 = vld [vmem:[%s204 + $0x6] sm:$0x3]
      %v233 = vld [vmem:[%s212] sm:$0x1]
      %v234 = vunpack.c.0.s8 %v233
      %vm235 = vcmask 1041408
      %v236 = vsel %vm235, %v229, -inf
      %v237 = vsel %vm235, %v230, -inf
      %v238 = vsel %vm235, %v231, -inf
      %v239 = vsel %vm235, %v232, -inf
      %v240 = vmax.f32 %v236, %v237
      %v241 = vmax.f32 %v238, %v239
      %v242 = vmax.f32 %v240, %v241
      %v243 = vsub.f32 %v229, %v242
      %v244 = vsub.f32 %v230, %v242
      %v245 = vsub.f32 %v231, %v242
      %v246 = vsub.f32 %v232, %v242
      %v247 = vmul.f32 %v243, 1.442695
      %v248 = vpow.pop %v247
      %v249 = vmul.f32 %v244, 1.442695
      %v250 = vpow.pop %v249
      %v251 = vmul.f32 %v245, 1.442695
      %v252 = vpow.pop %v251
      %v253 = vmul.f32 %v246, 1.442695
      %v254 = vpow.pop %v253
      %v255 = vsel %vm235, %v248, 0.0
      %v256 = vsel %vm235, %v250, 0.0
      %v257 = vadd.f32 %v255, %v256
      %v258 = vsel %vm235, %v252, 0.0
      %v259 = vadd.f32 %v257, %v258
      %v260 = vsel %vm235, %v254, 0.0
      %v261 = vadd.f32 %v259, %v260
      %v262 = vrcp.pop %v261
      %v263 = vmul.f32 %v261, %v262
      %v264 = vsub.f32 2.0, %v263
      %v265 = vmul.f32 %v262, %v264
      %v266 = vmul.f32 %v248, %v265
      %v267 = vmul.f32 %v250, %v265
      %v268 = vmul.f32 %v252, %v265
      %v269 = vmul.f32 %v254, %v265
      %v270 = vlog2.pop %v261
      %v271 = vmul.f32 %v270, 0.6931472
      %v272 = vsub.f32 %v271, %v243
      %v273 = vsub.f32 %v271, %v244
      %v274 = vsub.f32 %v271, %v245
      %v275 = vsub.f32 %v271, %v246
      %vm276 = vcmp.eq.s32.totalorder %v234, 0
      %vm277 = vcmp.eq.s32.totalorder %v234, 1
      %vm278 = vcmp.eq.s32.totalorder %v234, 2
      %vm279 = vcmp.eq.s32.totalorder %v234, 3
      %v280 = vsel %vm276, 1, 0
      %v281 = vsel %vm277, 1, 0
      %v282 = vsel %vm278, 1, 0
      %v283 = vsel %vm279, 1, 0
      %v284 = vcvt.s32.f32 %v280
      %v285 = vcvt.s32.f32 %v281
      %v286 = vcvt.s32.f32 %v282
      %v287 = vcvt.s32.f32 %v283
      %v288 = vsel %vm235, %v266, 0.0
      %v289 = vrot.slane %v288, 4
      %v290 = vadd.f32 %v288, %v289
      %v291 = vrot.slane %v290, 2
      %v292 = vadd.f32 %v290, %v291
      %v293 = vrot.slane %v292, 1
      %v294 = vadd.f32 %v292, %v293
      %v295 = vsel %vm235, %v267, 0.0
      %v296 = vrot.slane %v295, 4
      %v297 = vadd.f32 %v295, %v296
      %v298 = vrot.slane %v297, 2
      %v299 = vadd.f32 %v297, %v298
      %v300 = vrot.slane %v299, 1
      %v301 = vadd.f32 %v299, %v300
      %v302 = vsel %vm235, %v268, 0.0
      %v303 = vrot.slane %v302, 4
      %v304 = vadd.f32 %v302, %v303
      %v305 = vrot.slane %v304, 2
      %v306 = vadd.f32 %v304, %v305
      %v307 = vrot.slane %v306, 1
      %v308 = vadd.f32 %v306, %v307
      %v309 = vsel %vm235, %v269, 0.0
      %v310 = vrot.slane %v309, 4
      %v311 = vadd.f32 %v309, %v310
      %v312 = vrot.slane %v311, 2
      %v313 = vadd.f32 %v311, %v312
      %v314 = vrot.slane %v313, 1
      %v315 = vadd.f32 %v313, %v314
      %v316 = vmul.f32 %v266, %v284
      %v317 = vmul.f32 %v267, %v285
      %v318 = vmul.f32 %v268, %v286
      %v319 = vmul.f32 %v269, %v287
      %v320 = vsel %vm235, %v316, 0.0
      %v321 = vrot.slane %v320, 4
      %v322 = vadd.f32 %v320, %v321
      %v323 = vrot.slane %v322, 2
      %v324 = vadd.f32 %v322, %v323
      %v325 = vrot.slane %v324, 1
      %v326 = vadd.f32 %v324, %v325
      %v327 = vsel %vm235, %v317, 0.0
      %v328 = vrot.slane %v327, 4
      %v329 = vadd.f32 %v327, %v328
      %v330 = vrot.slane %v329, 2
      %v331 = vadd.f32 %v329, %v330
      %v332 = vrot.slane %v331, 1
      %v333 = vadd.f32 %v331, %v332
      %v334 = vsel %vm235, %v318, 0.0
      %v335 = vrot.slane %v334, 4
      %v336 = vadd.f32 %v334, %v335
      %v337 = vrot.slane %v336, 2
      %v338 = vadd.f32 %v336, %v337
      %v339 = vrot.slane %v338, 1
      %v340 = vadd.f32 %v338, %v339
      %v341 = vsel %vm235, %v319, 0.0
      %v342 = vrot.slane %v341, 4
      %v343 = vadd.f32 %v341, %v342
      %v344 = vrot.slane %v343, 2
      %v345 = vadd.f32 %v343, %v344
      %v346 = vrot.slane %v345, 1
      %v347 = vadd.f32 %v345, %v346
      %v348 = vsel %vm235, %v284, 0.0
      %v349 = vrot.slane %v348, 4
      %v350 = vadd.f32 %v348, %v349
      %v351 = vrot.slane %v350, 2
      %v352 = vadd.f32 %v350, %v351
      %v353 = vrot.slane %v352, 1
      %v354 = vadd.f32 %v352, %v353
      %v355 = vsel %vm235, %v285, 0.0
      %v356 = vrot.slane %v355, 4
      %v357 = vadd.f32 %v355, %v356
      %v358 = vrot.slane %v357, 2
      %v359 = vadd.f32 %v357, %v358
      %v360 = vrot.slane %v359, 1
      %v361 = vadd.f32 %v359, %v360
      %v362 = vsel %vm235, %v286, 0.0
      %v363 = vrot.slane %v362, 4
      %v364 = vadd.f32 %v362, %v363
      %v365 = vrot.slane %v364, 2
      %v366 = vadd.f32 %v364, %v365
      %v367 = vrot.slane %v366, 1
      %v368 = vadd.f32 %v366, %v367
      %v369 = vsel %vm235, %v287, 0.0
      %v370 = vrot.slane %v369, 4
      %v371 = vadd.f32 %v369, %v370
      %v372 = vrot.slane %v371, 2
      %v373 = vadd.f32 %v371, %v372
      %v374 = vrot.slane %v373, 1
      %v375 = vadd.f32 %v373, %v374
      %v376 = vmul.f32 %v272, %v284
      %v377 = vmul.f32 %v273, %v285
      %v378 = vmul.f32 %v274, %v286
      %v379 = vmul.f32 %v275, %v287
      %v380 = vsel %vm235, %v376, 0.0
      %v381 = vrot.slane %v380, 4
      %v382 = vadd.f32 %v380, %v381
      %v383 = vrot.slane %v382, 2
      %v384 = vadd.f32 %v382, %v383
      %v385 = vrot.slane %v384, 1
      %v386 = vadd.f32 %v384, %v385
      %v387 = vsel %vm235, %v377, 0.0
      %v388 = vrot.slane %v387, 4
      %v389 = vadd.f32 %v387, %v388
      %v390 = vrot.slane %v389, 2
      %v391 = vadd.f32 %v389, %v390
      %v392 = vrot.slane %v391, 1
      %v393 = vadd.f32 %v391, %v392
      %v394 = vsel %vm235, %v378, 0.0
      %v395 = vrot.slane %v394, 4
      %v396 = vadd.f32 %v394, %v395
      %v397 = vrot.slane %v396, 2
      %v398 = vadd.f32 %v396, %v397
      %v399 = vrot.slane %v398, 1
      %v400 = vadd.f32 %v398, %v399
      %v401 = vsel %vm235, %v379, 0.0
      %v402 = vrot.slane %v401, 4
      %v403 = vadd.f32 %v401, %v402
      %v404 = vrot.slane %v403, 2
      %v405 = vadd.f32 %v403, %v404
      %v406 = vrot.slane %v405, 1
      %v407 = vadd.f32 %v405, %v406
      %vm412 = vcmask 1041409
      %v413 = vsel %vm412, %v301, %v294
      %vm414 = vcmask 1042434
      %v415 = vsel %vm414, %v308, %v413
      %vm416 = vcmask 1043459
      %v417 = vsel %vm416, %v315, %v415
      %vm423 = vcmask 1045509
      %v424 = vsel %vm423, %v333, %v326
      %vm425 = vcmask 1046534
      %v426 = vsel %vm425, %v340, %v424
      %vm427 = vcmask 1047559
      %v428 = vsel %vm427, %v347, %v426
      %v434 = vsel %vm412, %v361, %v354
      %v435 = vsel %vm414, %v368, %v434
      %v436 = vsel %vm416, %v375, %v435
      %v442 = vsel %vm423, %v393, %v386
      %v443 = vsel %vm425, %v400, %v442
      %v444 = vsel %vm427, %v407, %v443
      %vm446 = vcmask 1043456
      %v447 = vsel %vm446, %v417, %v428
      %v448 = vsel %vm446, %v436, %v444
      %v449 = vld [vmem:[%s222] sm:$0xff]
      %v450 = vld [vmem:[%s222 + $0x8] sm:$0xff]
      %v451 = vadd.f32 %v449, %v447
      %v452 = vadd.f32 %v450, %v448
      %453 = vst [vmem:[%s222] sm:$0xff] %v451
      %454 = vst [vmem:[%s222 + $0x8] sm:$0xff] %v452
      %p455 = scmp.lt.s32.totalorder %s18, 1
      %s456 = scalar_select %p455, %s18, 1
      %p457 = scmp.lt.s32.totalorder %s19, 0
      %s458 = scalar_select %p457, %s19, 0
      %s459 = smul.addr %s458, 2
      %s460 = smul.addr %s456, 2
      %s461 = sadd.s32 %s459, %s460
      %s462 = smul.addr %s461, 8
      %s463 = scalar_lea.vmem %s2, %s462
      // Predicated region
      $region33: #{mutil_ce_dice_loss.1} parent=27 // pred_check
        %p464 = pneg %p112
      $region34: #{mutil_ce_dice_loss.1} parent=27 // pred_check_branch
        %466 = sbr.rel (%p464) target = $region36
      $region35: #{mutil_ce_dice_loss.1} parent=27 // pred_region
        _
      $region36: #{mutil_ce_dice_loss.1} parent=27 // pred_fallthru
        _
    $region28: #{mutil_ce_dice_loss.1} parent=5 // pred_fallthru
      _
    %p467 = scmp.le.s32.totalorder 2, %s8
    // Predicated region
    $region37: #{mutil_ce_dice_loss.1} parent=5 // pred_check
      %p468 = pneg %p467
    $region38: #{mutil_ce_dice_loss.1} parent=5 // pred_check_branch
      %470 = sbr.rel (%p468) target = $region40
    $region39: #{mutil_ce_dice_loss.1} parent=5 // pred_region
      %s471 = ssub.s32 %s8, 2
      // Predicated region
      $region41: #{mutil_ce_dice_loss.1} parent=39 // pred_check
        %p472 = pneg %p118
      $region42: #{mutil_ce_dice_loss.1} parent=39 // pred_check_branch
        %474 = sbr.rel (%p472) target = $region44
      $region43: #{mutil_ce_dice_loss.1} parent=39 // pred_region
        %p475 = scmp.lt.s32.totalorder %s21, 1
        %s476 = scalar_select %p475, %s21, 1
        %p477 = scmp.lt.s32.totalorder %s22, 0
        %s478 = scalar_select %p477, %s22, 0
        %s479 = smul.addr %s478, 2
        %s480 = smul.addr %s476, 2
        %s481 = sadd.s32 %s479, %s480
        %s482 = smul.addr %s481, 8
        %s483 = scalar_lea.vmem %s2, %s482
      $region44: #{mutil_ce_dice_loss.1} parent=39 // pred_fallthru
        _
    $region40: #{mutil_ce_dice_loss.1} parent=5 // pred_fallthru
      _
  $region6: #{mutil_ce_dice_loss.1} parent=0 // loop_footer
    %s12 = sadd.s32 1, %s8
  $region7: #{mutil_ce_dice_loss.1} parent=0 // loop_footer_branch
    %7 = sbr.rel target = $region3
  $region8: #{mutil_ce_dice_loss.1} parent=0 // loop_exit
    _

</llo_original>
